<compile_context>
chip_gen: v5e
topology: v5e:2x2
jax: 0.10.0
libtpu: 0.0.40
codegen_flags: <defaults>
</compile_context>

<pallas_src>
import functools

import jax
import jax.numpy as jnp
from jax import lax
from jax.experimental import pallas as pl
from jax.experimental.pallas import tpu as pltpu


def _round_up(x: int, m: int) -> int:
    return ((x + m - 1) // m) * m


def _choose_tile(n: int, target: int) -> int:
    """Multiple-of-8 sequence tile <= target; N is padded to a multiple of it.
    Prefers large tiles (MXU / store efficiency) with a small padded tail."""
    n8 = _round_up(n, 8)
    if n8 <= target:
        return n8
    lo = max(8, min(128, (target // 2 // 8) * 8))
    best_t, best_waste = 8, None
    t = (target // 8) * 8
    while t >= lo:
        waste = _round_up(n, t) - n
        if best_waste is None or waste < best_waste:   # ties keep the larger tile
            best_t, best_waste = t, waste
        t -= 8
    return best_t


def _vmem_limit_bytes() -> int:
    """48 MiB scoped VMEM on 128-MiB parts (v5e/v6e), ~38 MiB on v7x (64 MiB)."""
    try:
        cap = pltpu.get_tpu_info().vmem_capacity_bytes
    except Exception:
        cap = 128 * 1024 * 1024
    return int(min(cap * 3 // 5, 48 * 1024 * 1024))


# ----------------------------------------------------------------------------
# Kernel A: K/V projection, head-major output layout.
# ----------------------------------------------------------------------------
def _kv_proj_kernel(x_ref, w_ref, k_ref, v_ref, *, num_heads: int):
    """x_ref: (1, TN, D) bf16;  w_ref: (2, D, D) bf16 [W_k, W_v];
    k_ref / v_ref: (1, H, TN, hd) bf16 (head-major for the attention kernel)."""
    x = x_ref[0]                                                      # (TN, D) bf16
    tn, d = x.shape
    hd = d // num_heads
    # TODO(synk): hd<128 makes these head-major stores masked partial stores;
    # if the store slot ever binds, pack K/V lane-dense instead.
    for i, o_ref in enumerate((k_ref, v_ref)):
        y = jnp.dot(x, w_ref[i], preferred_element_type=jnp.float32)  # (TN, D) f32
        # Cast to bf16 BEFORE the head relayout: halves the transpose volume.
        y = y.astype(jnp.bfloat16).reshape(tn, num_heads, hd)
        o_ref[0] = jnp.swapaxes(y, 0, 1)                              # (H, TN, hd)


# ----------------------------------------------------------------------------
# Kernel B: fused Q projection + flash attention + output projection.
# ----------------------------------------------------------------------------
def _flash_attn_proj_kernel(x_ref, wq_ref, k_ref, v_ref, wp_ref, bp_ref,
                            out_ref, q_sc, m_sc, l_sc, acc_sc,
                            *, num_heads: int, n_valid: int, mask_kv: bool):
    """One (batch, query-tile) output block; K/V streamed over grid axis 2.
    x_ref: (1, TQ, D) bf16; wq_ref: (D, D) bf16 (scale folded in);
    k_ref/v_ref: (1, H, TK, hd) bf16; wp_ref: (D, D) bf16; bp_ref: (1, D) f32;
    out_ref: (1, TQ, D); scratch: q (H,TQ,hd) bf16, m/l (H,TQ,1) f32,
    acc (H,TQ,hd) f32."""
    ki = pl.program_id(2)

    @pl.when(ki == 0)
    def _init():
        # Fused Q projection: avoids writing/re-reading Q through HBM.
        xq = x_ref[0]                                                 # (TQ, D) bf16
        tq, d = xq.shape
        hd = d // num_heads
        q = jnp.dot(xq, wq_ref[...], preferred_element_type=jnp.float32)
        q = q.astype(jnp.bfloat16).reshape(tq, num_heads, hd)         # cast pre-relayout
        q_sc[...] = jnp.swapaxes(q, 0, 1)                             # (H, TQ, hd)
        m_sc[...] = jnp.full(m_sc.shape, -jnp.inf, dtype=m_sc.dtype)
        l_sc[...] = jnp.zeros(l_sc.shape, dtype=l_sc.dtype)
        acc_sc[...] = jnp.zeros(acc_sc.shape, dtype=acc_sc.dtype)

    k = k_ref[0]                                                      # (H, TK, hd)
    v = v_ref[0]
    tk = k.shape[1]

    # Head-batched QK^T on the MXU with f32 accumulation.
    s = jnp.einsum('hqd,hkd->hqk', q_sc[...], k,
                   preferred_element_type=jnp.float32)                # (H, TQ, TK)
    if mask_kv:
        col = ki * tk + lax.broadcasted_iota(jnp.int32, (1, 1, tk), 2)
        s = jnp.where(col < n_valid, s, jnp.float32(-1e30))

    # Online (flash) softmax update in f32.
    m_prev = m_sc[...]
    m_new = jnp.maximum(m_prev, jnp.max(s, axis=-1, keepdims=True))
    alpha = jnp.exp(m_prev - m_new)
    p = jnp.exp(s - m_new)
    l_sc[...] = alpha * l_sc[...] + jnp.sum(p, axis=-1, keepdims=True)
    acc_sc[...] = alpha * acc_sc[...] + jnp.einsum(
        'hqk,hkd->hqd', p.astype(jnp.bfloat16), v,
        preferred_element_type=jnp.float32)
    m_sc[...] = m_new
    # attn_drop is identity (p = 0.0).

    @pl.when(ki == pl.num_programs(2) - 1)
    def _finalize():
        h, tq, hd = acc_sc.shape
        ctx = acc_sc[...] * pl.reciprocal(l_sc[...], approx=False)    # (H, TQ, hd)
        ctx = ctx.astype(jnp.bfloat16)                                # cast pre-relayout
        ctx = jnp.swapaxes(ctx, 0, 1).reshape(tq, h * hd)             # (TQ, D)
        # TODO(synk): einsum('hqd,hde->qe') with host-reshaped W_proj would avoid
        # this relayout; verify its Mosaic lowering before switching.
        out = jnp.dot(ctx, wp_ref[...], preferred_element_type=jnp.float32)
        out = out + bp_ref[...]                                       # proj bias
        out_ref[0] = out.astype(out_ref.dtype)
        # proj_drop is identity (p = 0.0).


def attention_pallas(x, w_qkv, w_proj, b_proj, *, num_heads: int,
                     tile: int | None = None):
    """x: (B, N, D); w_qkv: (D, 3D) with y = x @ W; w_proj: (D, D); b_proj: (D,)."""
    B, N, D = x.shape
    assert D % num_heads == 0
    hd = D // num_heads
    scale = hd ** (-0.5)

    # Host-side weight prep: fold softmax scale into W_q, split K/V, cast bf16.
    w_q = (w_qkv[:, 0 * D:1 * D] * scale).astype(jnp.bfloat16)        # (D, D)
    w_kv = jnp.stack([w_qkv[:, 1 * D:2 * D], w_qkv[:, 2 * D:3 * D]],
                     axis=0).astype(jnp.bfloat16)                     # (2, D, D)
    w_p = w_proj.astype(jnp.bfloat16)                                 # (D, D)
    b_p = b_proj.reshape(1, D).astype(jnp.float32)                    # (1, D)

    # bf16 activations on the wire / MXU; f32 accumulation in-kernel.
    x_bf = x.astype(jnp.bfloat16)

    t = _choose_tile(N, tile if tile is not None else 256)
    n_pad = _round_up(N, t)
    if n_pad != N:
        x_bf = jnp.pad(x_bf, ((0, 0), (0, n_pad - N), (0, 0)))
    nt = n_pad // t
    mask_kv = n_pad != N

    vmem_limit = _vmem_limit_bytes()
    cparams_a = pltpu.CompilerParams(
        dimension_semantics=("parallel", "parallel"),
        vmem_limit_bytes=vmem_limit)
    cparams_b = pltpu.CompilerParams(
        dimension_semantics=("parallel", "parallel", "arbitrary"),
        vmem_limit_bytes=vmem_limit)

    bpe = 2  # bf16 bytes per element
    cost_a = pl.CostEstimate(
        flops=4 * B * n_pad * D * D,
        transcendentals=0,
        bytes_accessed=(B * n_pad * D * bpe + 2 * D * D * bpe
                        + 2 * B * n_pad * D * bpe))
    cost_b = pl.CostEstimate(
        flops=(2 * B * n_pad * D * D                                  # Q projection
               + 4 * B * num_heads * n_pad * n_pad * hd               # QK^T + PV
               + 2 * B * n_pad * D * D),                              # out projection
        transcendentals=B * num_heads * n_pad * n_pad,
        bytes_accessed=(B * n_pad * D * bpe + 2 * B * n_pad * D * bpe
                        + 2 * D * D * bpe + D * 4
                        + B * n_pad * D * jnp.dtype(x.dtype).itemsize))

    # --- Kernel A: K/V projection -> head-major (B, H, N_pad, hd) bf16 --------
    k, v = pl.pallas_call(
        functools.partial(_kv_proj_kernel, num_heads=num_heads),
        out_shape=tuple(
            jax.ShapeDtypeStruct((B, num_heads, n_pad, hd), jnp.bfloat16)
            for _ in range(2)),
        grid_spec=pltpu.PrefetchScalarGridSpec(
            num_scalar_prefetch=0,
            grid=(B, nt),
            in_specs=[
                pl.BlockSpec((1, t, D), lambda b, n: (b, n, 0)),              # x tile
                pl.BlockSpec((2, D, D), lambda b, n: (0, 0, 0),
                             pipeline_mode=pl.Buffered(1)),                   # W_k,W_v
            ],
            out_specs=[
                pl.BlockSpec((1, num_heads, t, hd), lambda b, n: (b, 0, n, 0)),
                pl.BlockSpec((1, num_heads, t, hd), lambda b, n: (b, 0, n, 0)),
            ],
        ),
        compiler_params=cparams_a,
        cost_estimate=cost_a,
    )(x_bf, w_kv)

    # --- Kernel B: fused Q-proj + flash attention + output projection ---------
    out = pl.pallas_call(
        functools.partial(_flash_attn_proj_kernel, num_heads=num_heads,
                          n_valid=N, mask_kv=mask_kv),
        out_shape=jax.ShapeDtypeStruct((B, n_pad, D), x.dtype),
        grid_spec=pltpu.PrefetchScalarGridSpec(
            num_scalar_prefetch=0,
            grid=(B, nt, nt),
            in_specs=[
                pl.BlockSpec((1, t, D), lambda b, qi, ki: (b, qi, 0)),        # x tile
                pl.BlockSpec((D, D), lambda b, qi, ki: (0, 0),
                             pipeline_mode=pl.Buffered(1)),                   # W_q
                pl.BlockSpec((1, num_heads, t, hd),
                             lambda b, qi, ki: (b, 0, ki, 0)),                # K tile
                pl.BlockSpec((1, num_heads, t, hd),
                             lambda b, qi, ki: (b, 0, ki, 0)),                # V tile
                pl.BlockSpec((D, D), lambda b, qi, ki: (0, 0),
                             pipeline_mode=pl.Buffered(1)),                   # W_proj
                pl.BlockSpec((1, D), lambda b, qi, ki: (0, 0),
                             pipeline_mode=pl.Buffered(1)),                   # b_proj
            ],
            out_specs=pl.BlockSpec((1, t, D), lambda b, qi, ki: (b, qi, 0)),
            scratch_shapes=[
                pltpu.VMEM((num_heads, t, hd), jnp.bfloat16),  # q (head-major)
                pltpu.VMEM((num_heads, t, 1), jnp.float32),    # running max
                pltpu.VMEM((num_heads, t, 1), jnp.float32),    # running sum
                pltpu.VMEM((num_heads, t, hd), jnp.float32),   # context accumulator
            ],
        ),
        compiler_params=cparams_b,
        cost_estimate=cost_b,
    )(x_bf, w_q, k, v, w_p, b_p)

    if n_pad != N:
        out = out[:, :N, :]
    return out


def attention_ref(x, w_qkv, w_proj, b_proj, *, num_heads: int):
    """Pure-JAX f32 reference mirroring the PyTorch forward."""
    B, N, D = x.shape
    head_dim = D // num_heads
    scale = head_dim ** (-0.5)
    qkv = x @ w_qkv                                                    # (B, N, 3D)
    qkv = qkv.reshape(B, N, 3, num_heads, head_dim).transpose(2, 0, 3, 1, 4)
    q, k, v = qkv[0] * scale, qkv[1], qkv[2]                           # (B, H, N, hd)
    attn = q @ jnp.swapaxes(k, -2, -1)                                 # (B, H, N, N)
    attn = jax.nn.softmax(attn, axis=-1)
    out = (attn @ v).transpose(0, 2, 1, 3).reshape(B, N, D)
    return out @ w_proj + b_proj


if __name__ == "__main__":
    B, N, D, H = 2, 16, 32, 8                                          # embed_dim=32, 8 heads
    key = jax.random.PRNGKey(0)
    kx, kq, kp, kb = jax.random.split(key, 4)

    x = jax.random.normal(kx, (B, N, D), dtype=jnp.float32)
    # qkv_bias=False, proj_bias=True (module defaults).
    w_qkv = jax.random.normal(kq, (D, 3 * D), dtype=jnp.float32) * 0.05
    w_proj = jax.random.normal(kp, (D, D), dtype=jnp.float32) * 0.05
    b_proj = jax.random.normal(kb, (D,), dtype=jnp.float32) * 0.01

    # tile=8 -> grid (B, 2, 2): exercises the query tiling AND the online
    # softmax across two KV tiles at these small shapes.
    out = attention_pallas(x, w_qkv, w_proj, b_proj, num_heads=H, tile=8)
    out = jax.block_until_ready(out)
    ref = attention_ref(x, w_qkv, w_proj, b_proj, num_heads=H)
    assert out.shape == (B, N, D)
    # bf16 MXU operands => relaxed tolerance vs f32 reference.
    assert jnp.allclose(out, ref, atol=2e-2, rtol=2e-2), "mismatch vs JAX reference"

    # Non-divisible sequence length: exercises the padded / masked-KV path
    # (the N=257-style case flagged in the performance review).
    N2 = 13
    x2 = x[:, :N2, :]
    out2 = attention_pallas(x2, w_qkv, w_proj, b_proj, num_heads=H, tile=8)
    out2 = jax.block_until_ready(out2)
    ref2 = attention_ref(x2, w_qkv, w_proj, b_proj, num_heads=H)
    assert out2.shape == (B, N2, D)
    assert jnp.allclose(out2, ref2, atol=2e-2, rtol=2e-2), "mismatch (padded path)"

    print("KERNEL_OK")
</pallas_src>

<mosaic_0001>
module attributes {stable_mosaic.version = 11 : i64} {
  func.func @_kv_proj_kernel(%arg0: i32, %arg1: i32, %arg2: memref<1x8x32xbf16, #tpu.memory_space<vmem>>, %arg3: memref<2x32x32xbf16, #tpu.memory_space<vmem>>, %arg4: memref<1x8x8x4xbf16, #tpu.memory_space<vmem>>, %arg5: memref<1x8x8x4xbf16, #tpu.memory_space<vmem>>) attributes {dimension_semantics = [#tpu.dimension_semantics<parallel>, #tpu.dimension_semantics<parallel>], iteration_bounds = array<i64: 2, 2>, scalar_prefetch = 0 : i64, scratch_operands = 0 : i64, tpu.core_type = #tpu.core_type<tc>, window_params = [{transform_indices = @transform_0, window_bounds = array<i64: 1, 8, 32>}, {pipeline_mode = #tpu.pipeline_mode<synchronous>, transform_indices = @transform_1, window_bounds = array<i64: 2, 32, 32>}, {transform_indices = @transform_2, window_bounds = array<i64: 1, 8, 8, 4>}, {transform_indices = @transform_3, window_bounds = array<i64: 1, 8, 8, 4>}]} {
    %c0 = arith.constant 0 : index
    %c0_0 = arith.constant 0 : index
    %c0_1 = arith.constant 0 : index
    %0 = vector.load %arg2[%c0, %c0_0, %c0_1] : memref<1x8x32xbf16, #tpu.memory_space<vmem>>, vector<1x8x32xbf16>
    %1 = vector.shape_cast %0 : vector<1x8x32xbf16> to vector<8x32xbf16>
    %c0_2 = arith.constant 0 : index
    %c0_3 = arith.constant 0 : index
    %c0_4 = arith.constant 0 : index
    %2 = vector.load %arg3[%c0_2, %c0_3, %c0_4] : memref<2x32x32xbf16, #tpu.memory_space<vmem>>, vector<1x32x32xbf16>
    %3 = vector.shape_cast %2 : vector<1x32x32xbf16> to vector<32x32xbf16>
    %cst = arith.constant dense<0.000000e+00> : vector<8x32xf32>
    %4 = tpu.matmul %1, %3, %cst {dimension_numbers = #tpu.dot_dimension_numbers<[1], [0], [0], [1], [0, 0, 1, 1], [], []>} : vector<8x32xbf16>, vector<32x32xbf16>, vector<8x32xf32> -> vector<8x32xf32>
    %5 = arith.truncf %4 : vector<8x32xf32> to vector<8x32xbf16>
    %6 = vector.shape_cast %5 : vector<8x32xbf16> to vector<8x8x4xbf16>
    %7 = tpu.transpose %6, [1, 0, 2] : vector<8x8x4xbf16> -> vector<8x8x4xbf16>
    %c0_5 = arith.constant 0 : index
    %c0_6 = arith.constant 0 : index
    %c0_7 = arith.constant 0 : index
    %c0_8 = arith.constant 0 : index
    %8 = vector.load %arg4[%c0_5, %c0_6, %c0_7, %c0_8] : memref<1x8x8x4xbf16, #tpu.memory_space<vmem>>, vector<1x8x8x4xbf16>
    %9 = vector.shape_cast %8 : vector<1x8x8x4xbf16> to vector<8x8x4xbf16>
    %10 = vector.shape_cast %7 : vector<8x8x4xbf16> to vector<1x8x8x4xbf16>
    tpu.vector_store %arg4[%c0_5, %c0_6, %c0_7, %c0_8], %10 {strides = array<i32>} : memref<1x8x8x4xbf16, #tpu.memory_space<vmem>>, vector<1x8x8x4xbf16>,
    %c1 = arith.constant 1 : index
    %c0_9 = arith.constant 0 : index
    %c0_10 = arith.constant 0 : index
    %11 = vector.load %arg3[%c1, %c0_9, %c0_10] : memref<2x32x32xbf16, #tpu.memory_space<vmem>>, vector<1x32x32xbf16>
    %12 = vector.shape_cast %11 : vector<1x32x32xbf16> to vector<32x32xbf16>
    %cst_11 = arith.constant dense<0.000000e+00> : vector<8x32xf32>
    %13 = tpu.matmul %1, %12, %cst_11 {dimension_numbers = #tpu.dot_dimension_numbers<[1], [0], [0], [1], [0, 0, 1, 1], [], []>} : vector<8x32xbf16>, vector<32x32xbf16>, vector<8x32xf32> -> vector<8x32xf32>
    %14 = arith.truncf %13 : vector<8x32xf32> to vector<8x32xbf16>
    %15 = vector.shape_cast %14 : vector<8x32xbf16> to vector<8x8x4xbf16>
    %16 = tpu.transpose %15, [1, 0, 2] : vector<8x8x4xbf16> -> vector<8x8x4xbf16>
    %c0_12 = arith.constant 0 : index
    %c0_13 = arith.constant 0 : index
    %c0_14 = arith.constant 0 : index
    %c0_15 = arith.constant 0 : index
    %17 = vector.load %arg5[%c0_12, %c0_13, %c0_14, %c0_15] : memref<1x8x8x4xbf16, #tpu.memory_space<vmem>>, vector<1x8x8x4xbf16>
    %18 = vector.shape_cast %17 : vector<1x8x8x4xbf16> to vector<8x8x4xbf16>
    %19 = vector.shape_cast %16 : vector<8x8x4xbf16> to vector<1x8x8x4xbf16>
    tpu.vector_store %arg5[%c0_12, %c0_13, %c0_14, %c0_15], %19 {strides = array<i32>} : memref<1x8x8x4xbf16, #tpu.memory_space<vmem>>, vector<1x8x8x4xbf16>,
    return
  }
  func.func @transform_0(%arg0: i32, %arg1: i32) -> (i32, i32, i32) {
    %c0_i32 = arith.constant 0 : i32
    %c0_i32_0 = arith.constant 0 : i32
    return %arg0, %arg1, %c0_i32 : i32, i32, i32
  }
  func.func @transform_1(%arg0: i32, %arg1: i32) -> (i32, i32, i32) {
    %c0_i32 = arith.constant 0 : i32
    %c0_i32_0 = arith.constant 0 : i32
    %c0_i32_1 = arith.constant 0 : i32
    %c0_i32_2 = arith.constant 0 : i32
    return %c0_i32, %c0_i32_0, %c0_i32_1 : i32, i32, i32
  }
  func.func @transform_2(%arg0: i32, %arg1: i32) -> (i32, i32, i32, i32) {
    %c0_i32 = arith.constant 0 : i32
    %c0_i32_0 = arith.constant 0 : i32
    %c0_i32_1 = arith.constant 0 : i32
    return %arg0, %c0_i32, %arg1, %c0_i32_0 : i32, i32, i32, i32
  }
  func.func @transform_3(%arg0: i32, %arg1: i32) -> (i32, i32, i32, i32) {
    %c0_i32 = arith.constant 0 : i32
    %c0_i32_0 = arith.constant 0 : i32
    %c0_i32_1 = arith.constant 0 : i32
    return %arg0, %c0_i32, %arg1, %c0_i32_0 : i32, i32, i32, i32
  }
}

</mosaic_0001>

<llo_original>
// kernel: tpu_custom_call.1
$region0: #{tpu_custom_call.1}
  #allocation0 [shape = 'u32[]', space=smem, size = 0x4, offset = 0x4, fixed_abs, tag = 'smem constant byte address 0x4 - core index']
  #allocation1 [shape = 'u32[72,128]{1,0:T(1,128)}', space=vmem, size = 0x9000, scoped, tag = 'internal scratch']
  %s0 = inlined_call_operand.hbm [shape: bf16[2,16,32], index: 0, kind: input, shape index: {}]
  %s1 = inlined_call_operand.hbm [shape: bf16[2,32,32], index: 1, kind: input, shape index: {}]
  %s2 = inlined_call_operand.vmem [shape: bf16[2,8,16,4], index: 2, kind: output, shape index: {0}]
  %s3 = inlined_call_operand.vmem [shape: bf16[2,8,16,4], index: 3, kind: output, shape index: {1}]
  %4 = xla_tuple %s2, %s3
  %s5 = sld [smem:[#allocation0]]
  $region131: #{tpu_custom_call.1} parent=0
    _
  %s7 = ssub.s32 1, %s5
  %s8 = scalar_select 0, %s7, %s5
  $region1: #{tpu_custom_call.1} parent=0
    #allocation2 [shape = 'u8[4096]{0}', space=vmem, size = 0x1000, scoped, tag = 'input window, operand 0']
    #allocation3 [shape = 's32[2]{0}', space=sflag, size = 0x8, scoped, tag = 'scoped memory for tpu_custom_call.1']
    #allocation4 [shape = 'u8[16384]{0}', space=vmem, size = 0x4000, scoped, tag = 'input window, operand 1, single buffered']
    #allocation5 [shape = 's32[1]{0}', space=sflag, size = 0x4, scoped, tag = 'scoped memory for tpu_custom_call.1']
    #allocation6 [shape = 'u8[32768]{0}', space=vmem, size = 0x8000, scoped, tag = 'output window, operand 0']
    #allocation7 [shape = 'u8[32768]{0}', space=vmem, size = 0x8000, scoped, tag = 'output window, operand 1']
    %9 = vsyncpa [#allocation3], 0
    %s10 = scalar_lea.sflag [#allocation3], 1
    %11 = vsyncpa %s10, 0
    %12 = vsyncpa [#allocation5], 0
    loop: start=0, step=1, limit=6
    $region2: #{tpu_custom_call.1} parent=1 // loop_pre_header
      _
    $region3: #{tpu_custom_call.1} parent=1 // loop_header
      %s14 = sphi 0, %s18
      %p15 = scmp.ge.s32.totalorder %s14, 6
      %s21 = sphi 0, %s33
      %s22 = sphi 0, %s29
      %s23 = sphi 0, %s21
      %s24 = sphi 0, %s22
      %s25 = sphi 0, %s23
      %s26 = sphi 0, %s24
      %s38 = sphi 0, %s40
      %s41 = sphi 0, %s38
      %s42 = sphi 0, %s41
      %s58 = sphi 0, %s42
      %s62 = sphi 0, %s62
      %s64 = sphi 0, %s62
      %s65 = sphi 0, %s64
      %s79 = sphi 0, %s65
      %s87 = sphi 0, %s89
      %s90 = sphi 0, %s87
      %s91 = sphi 0, %s90
      %s107 = sphi 0, %s91
      %s115 = sphi 0, %s117
      %s118 = sphi 0, %s115
      %s119 = sphi 0, %s118
      %s135 = sphi 0, %s119
    $region4: #{tpu_custom_call.1} parent=1 // loop_header_branch
      %17 = sbr.rel (%p15) target = $region8
    $region5: #{tpu_custom_call.1} parent=1 // loop_body
      %s19 = ssub.s32 %s14, 1
      %s20 = ssub.s32 %s14, 2
      %s27 = sadd.s32 1, %s22
      %p28 = scmp.ge.s32.totalorder %s27, 2
      %s29 = scalar_select %p28, 0, %s27
      %s30 = sadd.s32 1, %s21
      %s31 = scalar_select %p28, %s30, %s21
      %p32 = scmp.ge.s32.totalorder %s31, 2
      %s33 = scalar_select %p32, 0, %s31
      %s34 = ssub.s32 %s21, %s33
      %s35 = ssub.s32 %s22, %s29
      %s36 = sor.u32 %s34, %s35
      %p37 = scmp.eq.s32.totalorder %s36, 0
      %s39 = sadd.s32 %s38, 1
      %s40 = scalar_select %p37, %s38, %s39
      %p43 = pneg %p37
      %p44 = scmp.eq.s32.totalorder %s14, 3
      %p45 = por %p43, %p44
      %p46 = scmp.ne.s32.totalorder %s38, %s41
      %p47 = scmp.eq.s32.totalorder %s14, 0
      %p48 = por %p46, %p47
      %p49 = scmp.ne.s32.totalorder %s38, %s41
      %p50 = scmp.eq.s32.totalorder %s19, 3
      %p51 = por %p49, %p50
      %p52 = scmp.ne.s32.totalorder %s41, %s42
      %p53 = scmp.eq.s32.totalorder %s19, 0
      %p54 = por %p52, %p53
      %p55 = scmp.ne.s32.totalorder %s41, %s42
      %p56 = scmp.eq.s32.totalorder %s20, 3
      %p57 = por %p55, %p56
      %p59 = scmp.ne.s32.totalorder %s42, %s58
      %p60 = scmp.eq.s32.totalorder %s20, 0
      %p61 = por %p59, %p60
      %s63 = sadd.s32 %s62, 1
      %p66 = scmp.eq.s32.totalorder %s14, 3
      %p67 = scmp.ne.s32.totalorder %s62, %s64
      %p68 = scmp.eq.s32.totalorder %s14, 0
      %p69 = por %p67, %p68
      %p70 = scmp.ne.s32.totalorder %s62, %s64
      %p71 = scmp.eq.s32.totalorder %s19, 3
      %p72 = por %p70, %p71
      %p73 = scmp.ne.s32.totalorder %s64, %s65
      %p74 = scmp.eq.s32.totalorder %s19, 0
      %p75 = por %p73, %p74
      %p76 = scmp.ne.s32.totalorder %s64, %s65
      %p77 = scmp.eq.s32.totalorder %s20, 3
      %p78 = por %p76, %p77
      %p80 = scmp.ne.s32.totalorder %s65, %s79
      %p81 = scmp.eq.s32.totalorder %s20, 0
      %p82 = por %p80, %p81
      %s83 = ssub.s32 %s21, %s33
      %s84 = ssub.s32 %s22, %s29
      %s85 = sor.u32 %s83, %s84
      %p86 = scmp.eq.s32.totalorder %s85, 0
      %s88 = sadd.s32 %s87, 1
      %s89 = scalar_select %p86, %s87, %s88
      %p92 = pneg %p86
      %p93 = scmp.eq.s32.totalorder %s14, 3
      %p94 = por %p92, %p93
      %p95 = scmp.ne.s32.totalorder %s87, %s90
      %p96 = scmp.eq.s32.totalorder %s14, 0
      %p97 = por %p95, %p96
      %p98 = scmp.ne.s32.totalorder %s87, %s90
      %p99 = scmp.eq.s32.totalorder %s19, 3
      %p100 = por %p98, %p99
      %p101 = scmp.ne.s32.totalorder %s90, %s91
      %p102 = scmp.eq.s32.totalorder %s19, 0
      %p103 = por %p101, %p102
      %p104 = scmp.ne.s32.totalorder %s90, %s91
      %p105 = scmp.eq.s32.totalorder %s20, 3
      %p106 = por %p104, %p105
      %p108 = scmp.ne.s32.totalorder %s91, %s107
      %p109 = scmp.eq.s32.totalorder %s20, 0
      %p110 = por %p108, %p109
      %s111 = ssub.s32 %s21, %s33
      %s112 = ssub.s32 %s22, %s29
      %s113 = sor.u32 %s111, %s112
      %p114 = scmp.eq.s32.totalorder %s113, 0
      %s116 = sadd.s32 %s115, 1
      %s117 = scalar_select %p114, %s115, %s116
      %p120 = pneg %p114
      %p121 = scmp.eq.s32.totalorder %s14, 3
      %p122 = por %p120, %p121
      %p123 = scmp.ne.s32.totalorder %s115, %s118
      %p124 = scmp.eq.s32.totalorder %s14, 0
      %p125 = por %p123, %p124
      %p126 = scmp.ne.s32.totalorder %s115, %s118
      %p127 = scmp.eq.s32.totalorder %s19, 3
      %p128 = por %p126, %p127
      %p129 = scmp.ne.s32.totalorder %s118, %s119
      %p130 = scmp.eq.s32.totalorder %s19, 0
      %p131 = por %p129, %p130
      %p132 = scmp.ne.s32.totalorder %s118, %s119
      %p133 = scmp.eq.s32.totalorder %s20, 3
      %p134 = por %p132, %p133
      %p136 = scmp.ne.s32.totalorder %s119, %s135
      %p137 = scmp.eq.s32.totalorder %s20, 0
      %p138 = por %p136, %p137
      %p139 = scmp.le.s32.totalorder 1, %s14
      %p140 = scmp.lt.s32.totalorder %s14, 5
      %p141 = pnand %p139, %p140
      %p142 = pneg %p141
      // Predicated region
      $region9: #{tpu_custom_call.1} parent=5 // pred_check
        _
      $region10: #{tpu_custom_call.1} parent=5 // pred_check_branch
        %144 = sbr.rel (%p141) target = $region12
      $region11: #{tpu_custom_call.1} parent=5 // pred_region
        %s145 = ssub.s32 %s14, 1
        // Predicated region
        $region13: #{tpu_custom_call.1} parent=11 // pred_check
          %p146 = pneg %p75
        $region14: #{tpu_custom_call.1} parent=11 // pred_check_branch
          %148 = sbr.rel (%p146) target = $region16
        $region15: #{tpu_custom_call.1} parent=11 // pred_region
          %150 = vsyncadd [#allocation5], 0
          %s151 = sshll.u32 %s1, 4
          %s152 = int_to_ptr.hbm [resolvable:$true] %s151
          %s153 = sshll.u32 [#allocation4], 4
          %s154 = int_to_ptr.vmem [resolvable:$true] %s153
          %159 = dma.hbm_to_vmem [thread:$0]  %s152, 512, %s154, [#allocation5], 64, 64, 4
        $region16: #{tpu_custom_call.1} parent=11 // pred_fallthru
          _
      $region12: #{tpu_custom_call.1} parent=5 // pred_fallthru
        _
      %p160 = scmp.lt.s32.totalorder %s14, 4
      // Predicated region
      $region17: #{tpu_custom_call.1} parent=5 // pred_check
        %p161 = pneg %p160
      $region18: #{tpu_custom_call.1} parent=5 // pred_check_branch
        %163 = sbr.rel (%p161) target = $region20
      $region19: #{tpu_custom_call.1} parent=5 // pred_region
        // Predicated region
        $region21: #{tpu_custom_call.1} parent=19 // pred_check
          %p164 = pneg %p48
        $region22: #{tpu_custom_call.1} parent=19 // pred_check_branch
          %166 = sbr.rel (%p164) target = $region24
        $region23: #{tpu_custom_call.1} parent=19 // pred_region
          %s167 = sand.u32 %s38, 1
          %s168 = scalar_lea.sflag [#allocation3], %s167
          %s169 = sand.u32 %s38, 1
          %s170 = smul.addr %s169, 4
          %s171 = scalar_lea.vmem [#allocation2], %s170
          %173 = vsyncadd %s168, 0
          %s174 = smul.addr %s21, 2
          %s175 = sadd.s32 %s22, %s174
          %s176 = smul.addr %s175, 4
          %s177 = scalar_lea.hbm %s0, %s176
          %s179 = sshll.u32 %s177, 4
          %s180 = int_to_ptr.hbm [resolvable:$true] %s179
          %s181 = sshll.u32 %s171, 4
          %s182 = int_to_ptr.vmem [resolvable:$true] %s181
          %184 = dma.hbm_to_vmem [thread:$0]  %s180, 64, %s182, %s168
        $region24: #{tpu_custom_call.1} parent=19 // pred_fallthru
          _
      $region20: #{tpu_custom_call.1} parent=5 // pred_fallthru
        _
      %p185 = scmp.le.s32.totalorder 1, %s14
      %p186 = scmp.lt.s32.totalorder %s14, 5
      %p187 = pnand %p185, %p186
      %p188 = pneg %p187
      // Predicated region
      $region25: #{tpu_custom_call.1} parent=5 // pred_check
        _
      $region26: #{tpu_custom_call.1} parent=5 // pred_check_branch
        %190 = sbr.rel (%p187) target = $region28
      $region27: #{tpu_custom_call.1} parent=5 // pred_region
        %s191 = ssub.s32 %s14, 1
        %s192 = sand.u32 %s41, 1
        %s193 = scalar_lea.sflag [#allocation3], %s192
        %s194 = sand.u32 %s41, 1
        %s195 = smul.addr %s194, 4
        %s196 = scalar_lea.vmem [#allocation2], %s195
        // Predicated region
        $region29: #{tpu_custom_call.1} parent=27 // pred_check
          %p197 = pneg %p54
        $region30: #{tpu_custom_call.1} parent=27 // pred_check_branch
          %199 = sbr.rel (%p197) target = $region32
        $region31: #{tpu_custom_call.1} parent=27 // pred_region
          %201 = dma.done %s193, 64
        $region32: #{tpu_custom_call.1} parent=27 // pred_fallthru
          _
        // Predicated region
        $region33: #{tpu_custom_call.1} parent=27 // pred_check
          %p202 = pneg %p75
        $region34: #{tpu_custom_call.1} parent=27 // pred_check_branch
          %204 = sbr.rel (%p202) target = $region36
        $region35: #{tpu_custom_call.1} parent=27 // pred_region
          %206 = dma.done [#allocation5], 512
        $region36: #{tpu_custom_call.1} parent=27 // pred_fallthru
          _
        %s207 = sand.u32 %s41, 1
        %s208 = scalar_lea.sflag [#allocation3], %s207
        %s209 = sand.u32 %s41, 1
        %s210 = smul.addr %s209, 4
        %s211 = scalar_lea.vmem [#allocation2], %s210
        %p212 = pneg %p54
        %p213 = pneg %p51
        %p214 = pneg %p75
        %p215 = pneg %p72
        %p216 = pneg %p103
        %p217 = pneg %p100
        %s218 = sand.u32 %s90, 1
        %s219 = sand.u32 %s90, 1
        %s220 = smul.addr %s219, 32
        %s221 = scalar_lea.vmem [#allocation6], %s220
        %p222 = pneg %p131
        %p223 = pneg %p128
        %s224 = sand.u32 %s118, 1
        %s225 = sand.u32 %s118, 1
        %s226 = smul.addr %s225, 32
        %s227 = scalar_lea.vmem [#allocation7], %s226
        %v229 = vld [vmem:[%s196] sm:$0xf]
        %v230 = vld [vmem:[#allocation4] sm:$0xf]
        %v231 = vld [vmem:[#allocation4 + $0x4] sm:$0xf]
        %v232 = vld [vmem:[#allocation4 + $0x8] sm:$0xf]
        %v233 = vld [vmem:[#allocation4 + $0xc] sm:$0xf]
        %v238 = vunpack.c.l.b16 %v230
        %v239 = vunpack.c.l.b16 %v231
        %v240 = vunpack.c.l.b16 %v232
        %v241 = vunpack.c.l.b16 %v233
        %v242 = vpack.c.b16 %v239, %v238
        %v243 = vpack.c.b16 %v241, %v240
        %vm246 = vcmask 261120
        %v248 = vsel %vm246, %v229, 0
        %250 = vmatpush.bf16.msra.mxu0 0
        %251 = vmatpush.bf16.msra.mxu0 0
        %252 = vmatpush.bf16.msra.mxu0 0
        %253 = vmatpush.bf16.msra.mxu0 0
        %254 = vmatpush.bf16.msra.mxu0 0
        %255 = vmatpush.bf16.msra.mxu0 0
        %256 = vmatpush.bf16.msra.mxu0 %v243
        %257 = vmatpush.bf16.msra.mxu0 %v242
        %258 = vmatmul.bf16.gmra.mxu0 %v248
        %v259 = vpop.f32.mrf.mxu0
        %v260 = vadd.f32 0.0, %v259
        %v261 = vpop.f32.mrf.mxu0
        %262 = vdwg.mxu0
        %v263 = vpack.c.bf16 %v260, %v260
        %265 = vrot.lane.b32.xlu0 %v263, 124
        %v266 = vpop.permute.xlu0 %265
        %268 = vrot.lane.b32.xlu0 %v263, 120
        %v269 = vpop.permute.xlu0 %268
        %271 = vrot.lane.b32.xlu0 %v263, 116
        %v272 = vpop.permute.xlu0 %271
        %274 = vrot.lane.b32.xlu0 %v263, 112
        %v275 = vpop.permute.xlu0 %274
        %277 = vrot.lane.b32.xlu0 %v263, 108
        %v278 = vpop.permute.xlu0 %277
        %280 = vrot.lane.b32.xlu0 %v263, 104
        %v281 = vpop.permute.xlu0 %280
        %283 = vrot.lane.b32.xlu0 %v263, 100
        %v284 = vpop.permute.xlu0 %283
        %v286 = vrot.slane %v275, 4
        %vm287 = vcmask 1047556
        %v288 = vsel %vm287, %v286, %v263
        %v290 = vunpack.c.l.s4 1983009808
        %v291 = vunpack.c.0.s8 %v290
        %v292 = vperm.slane %v288, %v291
        %v293 = vrot.slane %v281, 4
        %v294 = vsel %vm287, %v293, %v269
        %v296 = vunpack.c.l.s4 1983009808
        %v297 = vunpack.c.0.s8 %v296
        %v298 = vperm.slane %v294, %v297
        %v299 = vrot.slane %v298, 4
        %v300 = vsel %vm287, %v299, %v292
        %v301 = vrot.slane %v292, 4
        %v302 = vsel %vm287, %v298, %v301
        %v304 = vunpack.c.l.s4 1934713408
        %v305 = vunpack.c.0.s8 %v304
        %v306 = vperm.slane %v300, %v305
        %v308 = vunpack.c.l.s4 1934713408
        %v309 = vunpack.c.0.s8 %v308
        %v310 = vperm.slane %v302, %v309
        %v311 = vrot.slane %v306, 4
        %v312 = vsel %vm287, 0, %v311
        %v313 = vrot.slane %v310, 4
        %v314 = vsel %vm287, 0, %v313
        %v315 = vrot.slane %v278, 4
        %v316 = vsel %vm287, %v315, %v266
        %v318 = vunpack.c.l.s4 1983009808
        %v319 = vunpack.c.0.s8 %v318
        %v320 = vperm.slane %v316, %v319
        %v321 = vrot.slane %v284, 4
        %v322 = vsel %vm287, %v321, %v272
        %v324 = vunpack.c.l.s4 1983009808
        %v325 = vunpack.c.0.s8 %v324
        %v326 = vperm.slane %v322, %v325
        %v327 = vrot.slane %v326, 4
        %v328 = vsel %vm287, %v327, %v320
        %v329 = vrot.slane %v320, 4
        %v330 = vsel %vm287, %v326, %v329
        %v332 = vunpack.c.l.s4 1934713408
        %v333 = vunpack.c.0.s8 %v332
        %v334 = vperm.slane %v328, %v333
        %v336 = vunpack.c.l.s4 1934713408
        %v337 = vunpack.c.0.s8 %v336
        %v338 = vperm.slane %v330, %v337
        %v339 = vrot.slane %v334, 4
        %v340 = vsel %vm287, 0, %v339
        %v341 = vrot.slane %v338, 4
        %v342 = vsel %vm287, 0, %v341
        %v345 = vpack.i.b16 %v334, %v306
        %v347 = vshrl.u32 %v306, 16
        %v348 = vshrl.u32 %v334, 16
        %v349 = vpack.i.b16 %v348, %v347
        %v353 = vpack.i.b16 %v340, %v312
        %v355 = vshrl.u32 %v312, 16
        %v356 = vshrl.u32 %v340, 16
        %v357 = vpack.i.b16 %v356, %v355
        %v361 = vpack.i.b16 %v338, %v310
        %v363 = vshrl.u32 %v310, 16
        %v364 = vshrl.u32 %v338, 16
        %v365 = vpack.i.b16 %v364, %v363
        %v369 = vpack.i.b16 %v342, %v314
        %v371 = vshrl.u32 %v314, 16
        %v372 = vshrl.u32 %v342, 16
        %v373 = vpack.i.b16 %v372, %v371
        %v375 = vrot.slane %v361, 4
        %v376 = vsel %vm287, %v375, %v345
        %v378 = vunpack.c.l.s4 1983009808
        %v379 = vunpack.c.0.s8 %v378
        %v380 = vperm.slane %v376, %v379
        %v381 = vrot.slane %v369, 4
        %v382 = vsel %vm287, %v381, %v353
        %v384 = vunpack.c.l.s4 1983009808
        %v385 = vunpack.c.0.s8 %v384
        %v386 = vperm.slane %v382, %v385
        %v387 = vrot.slane %v386, 4
        %v388 = vsel %vm287, %v387, %v380
        %v389 = vrot.slane %v380, 4
        %v390 = vsel %vm287, %v386, %v389
        %v392 = vunpack.c.l.s4 1934713408
        %v393 = vunpack.c.0.s8 %v392
        %v394 = vperm.slane %v388, %v393
        %v396 = vunpack.c.l.s4 1934713408
        %v397 = vunpack.c.0.s8 %v396
        %v398 = vperm.slane %v390, %v397
        %v399 = vrot.slane %v394, 4
        %v400 = vsel %vm287, 0, %v399
        %v401 = vrot.slane %v398, 4
        %v402 = vsel %vm287, 0, %v401
        %v403 = vrot.slane %v365, 4
        %v404 = vsel %vm287, %v403, %v349
        %v406 = vunpack.c.l.s4 1983009808
        %v407 = vunpack.c.0.s8 %v406
        %v408 = vperm.slane %v404, %v407
        %v409 = vrot.slane %v373, 4
        %v410 = vsel %vm287, %v409, %v357
        %v412 = vunpack.c.l.s4 1983009808
        %v413 = vunpack.c.0.s8 %v412
        %v414 = vperm.slane %v410, %v413
        %v415 = vrot.slane %v414, 4
        %v416 = vsel %vm287, %v415, %v408
        %v417 = vrot.slane %v408, 4
        %v418 = vsel %vm287, %v414, %v417
        %v420 = vunpack.c.l.s4 1934713408
        %v421 = vunpack.c.0.s8 %v420
        %v422 = vperm.slane %v416, %v421
        %v424 = vunpack.c.l.s4 1934713408
        %v425 = vunpack.c.0.s8 %v424
        %v426 = vperm.slane %v418, %v425
        %v427 = vrot.slane %v422, 4
        %v428 = vsel %vm287, 0, %v427
        %v429 = vrot.slane %v426, 4
        %v430 = vsel %vm287, 0, %v429
        %v433 = vpack.i.b16 %v422, %v394
        %v435 = vshrl.u32 %v394, 16
        %v436 = vshrl.u32 %v422, 16
        %v437 = vpack.i.b16 %v436, %v435
        %v441 = vpack.i.b16 %v428, %v400
        %v443 = vshrl.u32 %v400, 16
        %v444 = vshrl.u32 %v428, 16
        %v445 = vpack.i.b16 %v444, %v443
        %v449 = vpack.i.b16 %v426, %v398
        %v451 = vshrl.u32 %v398, 16
        %v452 = vshrl.u32 %v426, 16
        %v453 = vpack.i.b16 %v452, %v451
        %v457 = vpack.i.b16 %v430, %v402
        %v459 = vshrl.u32 %v402, 16
        %v460 = vshrl.u32 %v430, 16
        %v461 = vpack.i.b16 %v460, %v459
        %vm463 = vcmask 27648
        %464 = vst.msk [vmem:[%s221] sm:$0xf] %vm463, %v433
        %465 = vst.msk [vmem:[%s221 + $0x4] sm:$0xf] %vm463, %v437
        %466 = vst.msk [vmem:[%s221 + $0x8] sm:$0xf] %vm463, %v441
        %467 = vst.msk [vmem:[%s221 + $0xc] sm:$0xf] %vm463, %v445
        %468 = vst.msk [vmem:[%s221 + $0x10] sm:$0xf] %vm463, %v449
        %469 = vst.msk [vmem:[%s221 + $0x14] sm:$0xf] %vm463, %v453
        %470 = vst.msk [vmem:[%s221 + $0x18] sm:$0xf] %vm463, %v457
        %471 = vst.msk [vmem:[%s221 + $0x1c] sm:$0xf] %vm463, %v461
        %s472 = scalar_lea.vmem [#allocation4], 16
        %v473 = vld [vmem:[%s472] sm:$0xf]
        %v474 = vld [vmem:[%s472 + $0x4] sm:$0xf]
        %v475 = vld [vmem:[%s472 + $0x8] sm:$0xf]
        %v476 = vld [vmem:[%s472 + $0xc] sm:$0xf]
        %v481 = vunpack.c.l.b16 %v473
        %v482 = vunpack.c.l.b16 %v474
        %v483 = vunpack.c.l.b16 %v475
        %v484 = vunpack.c.l.b16 %v476
        %v485 = vpack.c.b16 %v482, %v481
        %v486 = vpack.c.b16 %v484, %v483
        %489 = vmatpush.bf16.msra.mxu0 0
        %490 = vmatpush.bf16.msra.mxu0 0
        %491 = vmatpush.bf16.msra.mxu0 0
        %492 = vmatpush.bf16.msra.mxu0 0
        %493 = vmatpush.bf16.msra.mxu0 0
        %494 = vmatpush.bf16.msra.mxu0 0
        %495 = vmatpush.bf16.msra.mxu0 %v486
        %496 = vmatpush.bf16.msra.mxu0 %v485
        %497 = vmatmul.bf16.gmra.mxu0 %v248
        %v498 = vpop.f32.mrf.mxu0
        %v499 = vadd.f32 0.0, %v498
        %v500 = vpop.f32.mrf.mxu0
        %501 = vdwg.mxu0
        %v502 = vpack.c.bf16 %v499, %v499
        %504 = vrot.lane.b32.xlu0 %v502, 124
        %v505 = vpop.permute.xlu0 %504
        %507 = vrot.lane.b32.xlu0 %v502, 120
        %v508 = vpop.permute.xlu0 %507
        %510 = vrot.lane.b32.xlu0 %v502, 116
        %v511 = vpop.permute.xlu0 %510
        %513 = vrot.lane.b32.xlu0 %v502, 112
        %v514 = vpop.permute.xlu0 %513
        %516 = vrot.lane.b32.xlu0 %v502, 108
        %v517 = vpop.permute.xlu0 %516
        %519 = vrot.lane.b32.xlu0 %v502, 104
        %v520 = vpop.permute.xlu0 %519
        %522 = vrot.lane.b32.xlu0 %v502, 100
        %v523 = vpop.permute.xlu0 %522
        %v525 = vrot.slane %v514, 4
        %v526 = vsel %vm287, %v525, %v502
        %v528 = vunpack.c.l.s4 1983009808
        %v529 = vunpack.c.0.s8 %v528
        %v530 = vperm.slane %v526, %v529
        %v531 = vrot.slane %v520, 4
        %v532 = vsel %vm287, %v531, %v508
        %v534 = vunpack.c.l.s4 1983009808
        %v535 = vunpack.c.0.s8 %v534
        %v536 = vperm.slane %v532, %v535
        %v537 = vrot.slane %v536, 4
        %v538 = vsel %vm287, %v537, %v530
        %v539 = vrot.slane %v530, 4
        %v540 = vsel %vm287, %v536, %v539
        %v542 = vunpack.c.l.s4 1934713408
        %v543 = vunpack.c.0.s8 %v542
        %v544 = vperm.slane %v538, %v543
        %v546 = vunpack.c.l.s4 1934713408
        %v547 = vunpack.c.0.s8 %v546
        %v548 = vperm.slane %v540, %v547
        %v549 = vrot.slane %v544, 4
        %v550 = vsel %vm287, 0, %v549
        %v551 = vrot.slane %v548, 4
        %v552 = vsel %vm287, 0, %v551
        %v553 = vrot.slane %v517, 4
        %v554 = vsel %vm287, %v553, %v505
        %v556 = vunpack.c.l.s4 1983009808
        %v557 = vunpack.c.0.s8 %v556
        %v558 = vperm.slane %v554, %v557
        %v559 = vrot.slane %v523, 4
        %v560 = vsel %vm287, %v559, %v511
        %v562 = vunpack.c.l.s4 1983009808
        %v563 = vunpack.c.0.s8 %v562
        %v564 = vperm.slane %v560, %v563
        %v565 = vrot.slane %v564, 4
        %v566 = vsel %vm287, %v565, %v558
        %v567 = vrot.slane %v558, 4
        %v568 = vsel %vm287, %v564, %v567
        %v570 = vunpack.c.l.s4 1934713408
        %v571 = vunpack.c.0.s8 %v570
        %v572 = vperm.slane %v566, %v571
        %v574 = vunpack.c.l.s4 1934713408
        %v575 = vunpack.c.0.s8 %v574
        %v576 = vperm.slane %v568, %v575
        %v577 = vrot.slane %v572, 4
        %v578 = vsel %vm287, 0, %v577
        %v579 = vrot.slane %v576, 4
        %v580 = vsel %vm287, 0, %v579
        %v583 = vpack.i.b16 %v572, %v544
        %v585 = vshrl.u32 %v544, 16
        %v586 = vshrl.u32 %v572, 16
        %v587 = vpack.i.b16 %v586, %v585
        %v591 = vpack.i.b16 %v578, %v550
        %v593 = vshrl.u32 %v550, 16
        %v594 = vshrl.u32 %v578, 16
        %v595 = vpack.i.b16 %v594, %v593
        %v599 = vpack.i.b16 %v576, %v548
        %v601 = vshrl.u32 %v548, 16
        %v602 = vshrl.u32 %v576, 16
        %v603 = vpack.i.b16 %v602, %v601
        %v607 = vpack.i.b16 %v580, %v552
        %v609 = vshrl.u32 %v552, 16
        %v610 = vshrl.u32 %v580, 16
        %v611 = vpack.i.b16 %v610, %v609
        %v613 = vrot.slane %v599, 4
        %v614 = vsel %vm287, %v613, %v583
        %v616 = vunpack.c.l.s4 1983009808
        %v617 = vunpack.c.0.s8 %v616
        %v618 = vperm.slane %v614, %v617
        %v619 = vrot.slane %v607, 4
        %v620 = vsel %vm287, %v619, %v591
        %v622 = vunpack.c.l.s4 1983009808
        %v623 = vunpack.c.0.s8 %v622
        %v624 = vperm.slane %v620, %v623
        %v625 = vrot.slane %v624, 4
        %v626 = vsel %vm287, %v625, %v618
        %v627 = vrot.slane %v618, 4
        %v628 = vsel %vm287, %v624, %v627
        %v630 = vunpack.c.l.s4 1934713408
        %v631 = vunpack.c.0.s8 %v630
        %v632 = vperm.slane %v626, %v631
        %v634 = vunpack.c.l.s4 1934713408
        %v635 = vunpack.c.0.s8 %v634
        %v636 = vperm.slane %v628, %v635
        %v637 = vrot.slane %v632, 4
        %v638 = vsel %vm287, 0, %v637
        %v639 = vrot.slane %v636, 4
        %v640 = vsel %vm287, 0, %v639
        %v641 = vrot.slane %v603, 4
        %v642 = vsel %vm287, %v641, %v587
        %v644 = vunpack.c.l.s4 1983009808
        %v645 = vunpack.c.0.s8 %v644
        %v646 = vperm.slane %v642, %v645
        %v647 = vrot.slane %v611, 4
        %v648 = vsel %vm287, %v647, %v595
        %v650 = vunpack.c.l.s4 1983009808
        %v651 = vunpack.c.0.s8 %v650
        %v652 = vperm.slane %v648, %v651
        %v653 = vrot.slane %v652, 4
        %v654 = vsel %vm287, %v653, %v646
        %v655 = vrot.slane %v646, 4
        %v656 = vsel %vm287, %v652, %v655
        %v658 = vunpack.c.l.s4 1934713408
        %v659 = vunpack.c.0.s8 %v658
        %v660 = vperm.slane %v654, %v659
        %v662 = vunpack.c.l.s4 1934713408
        %v663 = vunpack.c.0.s8 %v662
        %v664 = vperm.slane %v656, %v663
        %v665 = vrot.slane %v660, 4
        %v666 = vsel %vm287, 0, %v665
        %v667 = vrot.slane %v664, 4
        %v668 = vsel %vm287, 0, %v667
        %v671 = vpack.i.b16 %v660, %v632
        %v673 = vshrl.u32 %v632, 16
        %v674 = vshrl.u32 %v660, 16
        %v675 = vpack.i.b16 %v674, %v673
        %v679 = vpack.i.b16 %v666, %v638
        %v681 = vshrl.u32 %v638, 16
        %v682 = vshrl.u32 %v666, 16
        %v683 = vpack.i.b16 %v682, %v681
        %v687 = vpack.i.b16 %v664, %v636
        %v689 = vshrl.u32 %v636, 16
        %v690 = vshrl.u32 %v664, 16
        %v691 = vpack.i.b16 %v690, %v689
        %v695 = vpack.i.b16 %v668, %v640
        %v697 = vshrl.u32 %v640, 16
        %v698 = vshrl.u32 %v668, 16
        %v699 = vpack.i.b16 %v698, %v697
        %701 = vst.msk [vmem:[%s227] sm:$0xf] %vm463, %v671
        %702 = vst.msk [vmem:[%s227 + $0x4] sm:$0xf] %vm463, %v675
        %703 = vst.msk [vmem:[%s227 + $0x8] sm:$0xf] %vm463, %v679
        %704 = vst.msk [vmem:[%s227 + $0xc] sm:$0xf] %vm463, %v683
        %705 = vst.msk [vmem:[%s227 + $0x10] sm:$0xf] %vm463, %v687
        %706 = vst.msk [vmem:[%s227 + $0x14] sm:$0xf] %vm463, %v691
        %707 = vst.msk [vmem:[%s227 + $0x18] sm:$0xf] %vm463, %v695
        %708 = vst.msk [vmem:[%s227 + $0x1c] sm:$0xf] %vm463, %v699
        %s709 = sand.u32 %s90, 1
        %s710 = sand.u32 %s90, 1
        %s711 = smul.addr %s710, 32
        %s712 = scalar_lea.vmem [#allocation6], %s711
        %s713 = sand.u32 %s118, 1
        %s714 = sand.u32 %s118, 1
        %s715 = smul.addr %s714, 32
        %s716 = scalar_lea.vmem [#allocation7], %s715
        // Predicated region
        $region37: #{tpu_custom_call.1} parent=27 // pred_check
          %p717 = pneg %p100
        $region38: #{tpu_custom_call.1} parent=27 // pred_check_branch
          %719 = sbr.rel (%p717) target = $region40
        $region39: #{tpu_custom_call.1} parent=27 // pred_region
          %s720 = smul.addr %s23, 16
          %s721 = sadd.s32 %s24, %s720
          %s722 = smul.addr %s721, 4
          %s723 = scalar_lea.vmem %s2, %s722
          // Predicated region
          $region41: #{tpu_custom_call.1} parent=39 // pred_check
            _
          $region42: #{tpu_custom_call.1} parent=39 // pred_check_branch
            %725 = sbr.rel (0) target = $region44
          $region43: #{tpu_custom_call.1} parent=39 // pred_region
            // Predicated region
            $region45: #{tpu_custom_call.1} parent=43 // pred_check
              _
            $region46: #{tpu_custom_call.1} parent=43 // pred_check_branch
              %727 = sbr.rel target = $region48
            $region47: #{tpu_custom_call.1} parent=43 // pred_region
              // Predicated region
              $region60: #{tpu_custom_call.1} parent=47 // pred_check
                _
              $region61: #{tpu_custom_call.1} parent=47 // pred_check_branch
                %757 = sbr.rel (0) target = $region63
              $region62: #{tpu_custom_call.1} parent=47 // pred_region
                loop: start=0, step=1, limit=1
                $region64: #{tpu_custom_call.1} parent=62 // loop_pre_header
                  _
                $region65: #{tpu_custom_call.1} parent=62 // loop_header
                  %s759 = sphi 0, %s763
                  %p760 = scmp.ge.s32.totalorder %s759, 1
                  %s764 = sphi %s712, %s712
                  %s765 = sphi %s723, %s723
                $region66: #{tpu_custom_call.1} parent=62 // loop_header_branch
                  %762 = sbr.rel (%p760) target = $region70
                $region67: #{tpu_custom_call.1} parent=62 // loop_body
                  _
                $region68: #{tpu_custom_call.1} parent=62 // loop_footer
                  %s763 = sadd.s32 1, %s759
                $region69: #{tpu_custom_call.1} parent=62 // loop_footer_branch
                  %758 = sbr.rel target = $region65
                $region70: #{tpu_custom_call.1} parent=62 // loop_exit
                  _
                %s767 = ssub.s32 16, 1
                loop: start=0, step=1, limit=1
                $region71: #{tpu_custom_call.1} parent=62 // loop_pre_header
                  _
                $region72: #{tpu_custom_call.1} parent=62 // loop_header
                  %s769 = sphi 0, %s773
                  %p770 = scmp.ge.s32.totalorder %s769, 1
                  %s774 = sphi %s712, %s712
                  %s775 = sphi %s723, %s723
                $region73: #{tpu_custom_call.1} parent=62 // loop_header_branch
                  %772 = sbr.rel (%p770) target = $region77
                $region74: #{tpu_custom_call.1} parent=62 // loop_body
                  %v776 = vld [vmem:[%s774] sm:%s767]
                  %777 = vst [vmem:[%s775] sm:%s767] %v776
                  %v778 = vld [vmem:[%s774 + $0x4] sm:%s767]
                  %779 = vst [vmem:[%s775 + $0x8] sm:%s767] %v778
                  %v780 = vld [vmem:[%s774 + $0x8] sm:%s767]
                  %781 = vst [vmem:[%s775 + $0x10] sm:%s767] %v780
                  %v782 = vld [vmem:[%s774 + $0xc] sm:%s767]
                  %783 = vst [vmem:[%s775 + $0x18] sm:%s767] %v782
                  %v784 = vld [vmem:[%s774 + $0x10] sm:%s767]
                  %785 = vst [vmem:[%s775 + $0x20] sm:%s767] %v784
                  %v786 = vld [vmem:[%s774 + $0x14] sm:%s767]
                  %787 = vst [vmem:[%s775 + $0x28] sm:%s767] %v786
                  %v788 = vld [vmem:[%s774 + $0x18] sm:%s767]
                  %789 = vst [vmem:[%s775 + $0x30] sm:%s767] %v788
                  %v790 = vld [vmem:[%s774 + $0x1c] sm:%s767]
                  %791 = vst [vmem:[%s775 + $0x38] sm:%s767] %v790
                $region75: #{tpu_custom_call.1} parent=62 // loop_footer
                  %s773 = sadd.s32 1, %s769
                $region76: #{tpu_custom_call.1} parent=62 // loop_footer_branch
                  %768 = sbr.rel target = $region72
                $region77: #{tpu_custom_call.1} parent=62 // loop_exit
                  _
              $region63: #{tpu_custom_call.1} parent=47 // pred_fallthru
                _
            $region48: #{tpu_custom_call.1} parent=43 // pred_fallthru
              _
            // Predicated region
            $region49: #{tpu_custom_call.1} parent=43 // pred_check
              _
            $region50: #{tpu_custom_call.1} parent=43 // pred_check_branch
              %729 = sbr.rel (0) target = $region52
            $region51: #{tpu_custom_call.1} parent=43 // pred_region
              %s731 = ssub.s32 16, 1
              loop: start=0, step=1, limit=1
              $region53: #{tpu_custom_call.1} parent=51 // loop_pre_header
                _
              $region54: #{tpu_custom_call.1} parent=51 // loop_header
                %s733 = sphi 0, %s737
                %p734 = scmp.ge.s32.totalorder %s733, 1
                %s738 = sphi %s712, %s712
                %s739 = sphi %s723, %s723
              $region55: #{tpu_custom_call.1} parent=51 // loop_header_branch
                %736 = sbr.rel (%p734) target = $region59
              $region56: #{tpu_custom_call.1} parent=51 // loop_body
                %v740 = vld [vmem:[%s738] sm:%s731]
                %741 = vst [vmem:[%s739] sm:%s731] %v740
                %v742 = vld [vmem:[%s738 + $0x4] sm:%s731]
                %743 = vst [vmem:[%s739 + $0x8] sm:%s731] %v742
                %v744 = vld [vmem:[%s738 + $0x8] sm:%s731]
                %745 = vst [vmem:[%s739 + $0x10] sm:%s731] %v744
                %v746 = vld [vmem:[%s738 + $0xc] sm:%s731]
                %747 = vst [vmem:[%s739 + $0x18] sm:%s731] %v746
                %v748 = vld [vmem:[%s738 + $0x10] sm:%s731]
                %749 = vst [vmem:[%s739 + $0x20] sm:%s731] %v748
                %v750 = vld [vmem:[%s738 + $0x14] sm:%s731]
                %751 = vst [vmem:[%s739 + $0x28] sm:%s731] %v750
                %v752 = vld [vmem:[%s738 + $0x18] sm:%s731]
                %753 = vst [vmem:[%s739 + $0x30] sm:%s731] %v752
                %v754 = vld [vmem:[%s738 + $0x1c] sm:%s731]
                %755 = vst [vmem:[%s739 + $0x38] sm:%s731] %v754
              $region57: #{tpu_custom_call.1} parent=51 // loop_footer
                %s737 = sadd.s32 1, %s733
              $region58: #{tpu_custom_call.1} parent=51 // loop_footer_branch
                %732 = sbr.rel target = $region54
              $region59: #{tpu_custom_call.1} parent=51 // loop_exit
                _
            $region52: #{tpu_custom_call.1} parent=43 // pred_fallthru
              _
          $region44: #{tpu_custom_call.1} parent=39 // pred_fallthru
            _
          %792 = vnop
        $region40: #{tpu_custom_call.1} parent=27 // pred_fallthru
          _
        // Predicated region
        $region78: #{tpu_custom_call.1} parent=27 // pred_check
          %p793 = pneg %p128
        $region79: #{tpu_custom_call.1} parent=27 // pred_check_branch
          %795 = sbr.rel (%p793) target = $region81
        $region80: #{tpu_custom_call.1} parent=27 // pred_region
          %s796 = smul.addr %s23, 16
          %s797 = sadd.s32 %s24, %s796
          %s798 = smul.addr %s797, 4
          %s799 = scalar_lea.vmem %s3, %s798
          // Predicated region
          $region82: #{tpu_custom_call.1} parent=80 // pred_check
            _
          $region83: #{tpu_custom_call.1} parent=80 // pred_check_branch
            %801 = sbr.rel (0) target = $region85
          $region84: #{tpu_custom_call.1} parent=80 // pred_region
            // Predicated region
            $region86: #{tpu_custom_call.1} parent=84 // pred_check
              _
            $region87: #{tpu_custom_call.1} parent=84 // pred_check_branch
              %803 = sbr.rel target = $region89
            $region88: #{tpu_custom_call.1} parent=84 // pred_region
              // Predicated region
              $region101: #{tpu_custom_call.1} parent=88 // pred_check
                _
              $region102: #{tpu_custom_call.1} parent=88 // pred_check_branch
                %833 = sbr.rel (0) target = $region104
              $region103: #{tpu_custom_call.1} parent=88 // pred_region
                loop: start=0, step=1, limit=1
                $region105: #{tpu_custom_call.1} parent=103 // loop_pre_header
                  _
                $region106: #{tpu_custom_call.1} parent=103 // loop_header
                  %s835 = sphi 0, %s839
                  %p836 = scmp.ge.s32.totalorder %s835, 1
                  %s840 = sphi %s716, %s716
                  %s841 = sphi %s799, %s799
                $region107: #{tpu_custom_call.1} parent=103 // loop_header_branch
                  %838 = sbr.rel (%p836) target = $region111
                $region108: #{tpu_custom_call.1} parent=103 // loop_body
                  _
                $region109: #{tpu_custom_call.1} parent=103 // loop_footer
                  %s839 = sadd.s32 1, %s835
                $region110: #{tpu_custom_call.1} parent=103 // loop_footer_branch
                  %834 = sbr.rel target = $region106
                $region111: #{tpu_custom_call.1} parent=103 // loop_exit
                  _
                %s843 = ssub.s32 16, 1
                loop: start=0, step=1, limit=1
                $region112: #{tpu_custom_call.1} parent=103 // loop_pre_header
                  _
                $region113: #{tpu_custom_call.1} parent=103 // loop_header
                  %s845 = sphi 0, %s849
                  %p846 = scmp.ge.s32.totalorder %s845, 1
                  %s850 = sphi %s716, %s716
                  %s851 = sphi %s799, %s799
                $region114: #{tpu_custom_call.1} parent=103 // loop_header_branch
                  %848 = sbr.rel (%p846) target = $region118
                $region115: #{tpu_custom_call.1} parent=103 // loop_body
                  %v852 = vld [vmem:[%s850] sm:%s843]
                  %853 = vst [vmem:[%s851] sm:%s843] %v852
                  %v854 = vld [vmem:[%s850 + $0x4] sm:%s843]
                  %855 = vst [vmem:[%s851 + $0x8] sm:%s843] %v854
                  %v856 = vld [vmem:[%s850 + $0x8] sm:%s843]
                  %857 = vst [vmem:[%s851 + $0x10] sm:%s843] %v856
                  %v858 = vld [vmem:[%s850 + $0xc] sm:%s843]
                  %859 = vst [vmem:[%s851 + $0x18] sm:%s843] %v858
                  %v860 = vld [vmem:[%s850 + $0x10] sm:%s843]
                  %861 = vst [vmem:[%s851 + $0x20] sm:%s843] %v860
                  %v862 = vld [vmem:[%s850 + $0x14] sm:%s843]
                  %863 = vst [vmem:[%s851 + $0x28] sm:%s843] %v862
                  %v864 = vld [vmem:[%s850 + $0x18] sm:%s843]
                  %865 = vst [vmem:[%s851 + $0x30] sm:%s843] %v864
                  %v866 = vld [vmem:[%s850 + $0x1c] sm:%s843]
                  %867 = vst [vmem:[%s851 + $0x38] sm:%s843] %v866
                $region116: #{tpu_custom_call.1} parent=103 // loop_footer
                  %s849 = sadd.s32 1, %s845
                $region117: #{tpu_custom_call.1} parent=103 // loop_footer_branch
                  %844 = sbr.rel target = $region113
                $region118: #{tpu_custom_call.1} parent=103 // loop_exit
                  _
              $region104: #{tpu_custom_call.1} parent=88 // pred_fallthru
                _
            $region89: #{tpu_custom_call.1} parent=84 // pred_fallthru
              _
            // Predicated region
            $region90: #{tpu_custom_call.1} parent=84 // pred_check
              _
            $region91: #{tpu_custom_call.1} parent=84 // pred_check_branch
              %805 = sbr.rel (0) target = $region93
            $region92: #{tpu_custom_call.1} parent=84 // pred_region
              %s807 = ssub.s32 16, 1
              loop: start=0, step=1, limit=1
              $region94: #{tpu_custom_call.1} parent=92 // loop_pre_header
                _
              $region95: #{tpu_custom_call.1} parent=92 // loop_header
                %s809 = sphi 0, %s813
                %p810 = scmp.ge.s32.totalorder %s809, 1
                %s814 = sphi %s716, %s716
                %s815 = sphi %s799, %s799
              $region96: #{tpu_custom_call.1} parent=92 // loop_header_branch
                %812 = sbr.rel (%p810) target = $region100
              $region97: #{tpu_custom_call.1} parent=92 // loop_body
                %v816 = vld [vmem:[%s814] sm:%s807]
                %817 = vst [vmem:[%s815] sm:%s807] %v816
                %v818 = vld [vmem:[%s814 + $0x4] sm:%s807]
                %819 = vst [vmem:[%s815 + $0x8] sm:%s807] %v818
                %v820 = vld [vmem:[%s814 + $0x8] sm:%s807]
                %821 = vst [vmem:[%s815 + $0x10] sm:%s807] %v820
                %v822 = vld [vmem:[%s814 + $0xc] sm:%s807]
                %823 = vst [vmem:[%s815 + $0x18] sm:%s807] %v822
                %v824 = vld [vmem:[%s814 + $0x10] sm:%s807]
                %825 = vst [vmem:[%s815 + $0x20] sm:%s807] %v824
                %v826 = vld [vmem:[%s814 + $0x14] sm:%s807]
                %827 = vst [vmem:[%s815 + $0x28] sm:%s807] %v826
                %v828 = vld [vmem:[%s814 + $0x18] sm:%s807]
                %829 = vst [vmem:[%s815 + $0x30] sm:%s807] %v828
                %v830 = vld [vmem:[%s814 + $0x1c] sm:%s807]
                %831 = vst [vmem:[%s815 + $0x38] sm:%s807] %v830
              $region98: #{tpu_custom_call.1} parent=92 // loop_footer
                %s813 = sadd.s32 1, %s809
              $region99: #{tpu_custom_call.1} parent=92 // loop_footer_branch
                %808 = sbr.rel target = $region95
              $region100: #{tpu_custom_call.1} parent=92 // loop_exit
                _
            $region93: #{tpu_custom_call.1} parent=84 // pred_fallthru
              _
          $region85: #{tpu_custom_call.1} parent=80 // pred_fallthru
            _
          %868 = vnop
        $region81: #{tpu_custom_call.1} parent=27 // pred_fallthru
          _
      $region28: #{tpu_custom_call.1} parent=5 // pred_fallthru
        _
      %p869 = scmp.le.s32.totalorder 2, %s14
      // Predicated region
      $region119: #{tpu_custom_call.1} parent=5 // pred_check
        %p870 = pneg %p869
      $region120: #{tpu_custom_call.1} parent=5 // pred_check_branch
        %872 = sbr.rel (%p870) target = $region122
      $region121: #{tpu_custom_call.1} parent=5 // pred_region
        %s873 = ssub.s32 %s14, 2
        // Predicated region
        $region123: #{tpu_custom_call.1} parent=121 // pred_check
          %p874 = pneg %p106
        $region124: #{tpu_custom_call.1} parent=121 // pred_check_branch
          %876 = sbr.rel (%p874) target = $region126
        $region125: #{tpu_custom_call.1} parent=121 // pred_region
          %s877 = sand.u32 %s91, 1
          %s878 = sand.u32 %s91, 1
          %s879 = smul.addr %s878, 32
          %s880 = scalar_lea.vmem [#allocation6], %s879
        $region126: #{tpu_custom_call.1} parent=121 // pred_fallthru
          _
        // Predicated region
        $region127: #{tpu_custom_call.1} parent=121 // pred_check
          %p881 = pneg %p134
        $region128: #{tpu_custom_call.1} parent=121 // pred_check_branch
          %883 = sbr.rel (%p881) target = $region130
        $region129: #{tpu_custom_call.1} parent=121 // pred_region
          %s884 = sand.u32 %s119, 1
          %s885 = sand.u32 %s119, 1
          %s886 = smul.addr %s885, 32
          %s887 = scalar_lea.vmem [#allocation7], %s886
        $region130: #{tpu_custom_call.1} parent=121 // pred_fallthru
          _
      $region122: #{tpu_custom_call.1} parent=5 // pred_fallthru
        _
    $region6: #{tpu_custom_call.1} parent=1 // loop_footer
      %s18 = sadd.s32 1, %s14
    $region7: #{tpu_custom_call.1} parent=1 // loop_footer_branch
      %13 = sbr.rel target = $region3
    $region8: #{tpu_custom_call.1} parent=1 // loop_exit
      _
    %888 = vsyncpa [#allocation3], 1
    %s889 = scalar_lea.sflag [#allocation3], 1
    %890 = vsyncpa %s889, 1
    %891 = vsyncpa [#allocation5], 1

</llo_original>
